<compile_context>
chip_gen: v6e
topology: v6e:2x2x1
jax: 0.10.0
libtpu: 0.0.40
codegen_flags: <defaults>
</compile_context>

<pallas_src>
import math

import jax
import jax.numpy as jnp
import numpy as np
from jax import lax
from jax.experimental import pallas as pl
from jax.experimental.pallas import tpu as pltpu


def _round_up(x, m):
    return (x + m - 1) // m * m


def _ccconv_kernel(p_ref, w_ref, base_ref, o_ref):
    """One (image, M-tile) per grid step.

    p_ref:    (KPAD, MT)       bf16  im2col patches; contraction on sublanes,
                                     spatial positions dense on the 128-lane axis
    w_ref:    (COUT_PAD, KPAD) bf16  folded conv weights (image channels only)
    base_ref: (COUT_PAD, MT)   f32   bias + coordinate-channel contribution
    o_ref:    (COUT_PAD, MT)   f32   output tile; (N, C, M) -> NCHW via reshape on host
    """
    o_ref[...] = (
        jnp.dot(w_ref[...], p_ref[...], preferred_element_type=jnp.float32)
        + base_ref[...]
    ).astype(o_ref.dtype)


def coordconv2d_forward(x_nchw, weight_oihw, bias, kernel_size):
    """x: (N, Cin, H, W); weight: (Cout, Cin+2, KH, KW); bias: (Cout,).

    VALID conv, stride 1 (torch.nn.Conv2d defaults)."""
    N, Cin, H, W = x_nchw.shape
    KH = KW = int(kernel_size)
    Cout = weight_oihw.shape[0]
    Hout, Wout = H - KH + 1, W - KW + 1
    assert Hout > 0 and Wout > 0

    f32 = jnp.float32
    orig_dtype = x_nchw.dtype

    M = Hout * Wout                       # output spatial positions per image
    M_TILE = 128 if M <= 1024 else 512    # lane-axis tile (multiple of 128)
    MPAD = _round_up(M, M_TILE)
    K_IMG = KH * KW * Cin                 # folded contraction dim
    KPAD = _round_up(K_IMG, 16)           # bf16 sublane packing
    COUT_PAD = _round_up(Cout, 8)

    # ---------------------------------------------------------------------
    # Data-independent part: the coordinate channels are known functions of
    # position, so their conv depends only on (weights, H, W).  Compute once
    # (tiny 2-channel conv) and fold the bias in.  Guard H==1 / W==1.
    # ---------------------------------------------------------------------
    denom_w = float(max(W - 1, 1))
    denom_h = float(max(H - 1, 1))
    gx = jnp.broadcast_to(2.0 * (jnp.arange(W, dtype=f32) / denom_w) - 1.0, (H, W))
    gy = jnp.broadcast_to((2.0 * (jnp.arange(H, dtype=f32) / denom_h) - 1.0)[:, None], (H, W))
    coord_img = jnp.stack([gx, gy], axis=0)[None]                    # (1, 2, H, W)

    w_f32 = weight_oihw.astype(f32)
    w_coord = w_f32[:, Cin:, :, :]                                   # (Cout, 2, KH, KW)
    coord_term = lax.conv_general_dilated(
        coord_img, w_coord, (1, 1), "VALID",
        dimension_numbers=("NCHW", "OIHW", "NCHW"),
        precision=lax.Precision.HIGHEST)[0]                          # (Cout, Hout, Wout)
    base = coord_term.reshape(Cout, M) + bias.astype(f32)[:, None]
    base = jnp.pad(base, ((0, COUT_PAD - Cout), (0, MPAD - M)))      # (COUT_PAD, MPAD) f32

    # Folded image weights: w_img[co, (kh*KW+kw)*Cin + ci] = weight[co, ci, kh, kw]
    w_img = jnp.transpose(w_f32[:, :Cin, :, :], (0, 2, 3, 1)).reshape(Cout, K_IMG)
    w_img = jnp.pad(w_img, ((0, COUT_PAD - Cout), (0, KPAD - K_IMG))).astype(jnp.bfloat16)

    # ---------------------------------------------------------------------
    # Data-dependent part: lane-dense host im2col -> patches (N, KPAD, MPAD)
    # bf16, with patches[n, (kh*KW+kw)*Cin+ci, ho*Wout+wo] = x[n, ci, ho+kh, wo+kw].
    # TODO(synk): for large Cin, build the taps inside the kernel from a single
    # (H*W, Cin)-flattened VMEM slab (shifted sublane slices + lane concat) to
    # avoid the KH*KW x HBM read amplification of host im2col; at Cin=4 the
    # lane-dense im2col is the better trade (review recommendation).
    # ---------------------------------------------------------------------
    x_bf = jnp.transpose(x_nchw, (0, 2, 3, 1)).astype(jnp.bfloat16)  # (N, H, W, Cin)
    taps = []
    for kh in range(KH):
        for kw in range(KW):
            win = x_bf[:, kh:kh + Hout, kw:kw + Wout, :]             # (N, Hout, Wout, Cin)
            taps.append(win.reshape(N, M, Cin))
    patches = jnp.concatenate(taps, axis=-1)                         # (N, M, K_IMG)
    patches = jnp.transpose(patches, (0, 2, 1))                      # (N, K_IMG, M)
    patches = jnp.pad(patches, ((0, 0), (0, KPAD - K_IMG), (0, MPAD - M)))

    grid = (N, MPAD // M_TILE)

    out_padded = pl.pallas_call(
        _ccconv_kernel,
        out_shape=jax.ShapeDtypeStruct((N, COUT_PAD, MPAD), f32),
        grid_spec=pltpu.PrefetchScalarGridSpec(
            num_scalar_prefetch=0,
            grid=grid,
            in_specs=[
                pl.BlockSpec((None, KPAD, M_TILE), lambda n, m: (n, 0, m)),
                pl.BlockSpec((COUT_PAD, KPAD), lambda n, m: (0, 0)),
                pl.BlockSpec((COUT_PAD, M_TILE), lambda n, m: (0, m)),
            ],
            out_specs=pl.BlockSpec((None, COUT_PAD, M_TILE), lambda n, m: (n, 0, m)),
        ),
        compiler_params=pltpu.CompilerParams(
            dimension_semantics=("parallel", "parallel"),
            vmem_limit_bytes=32 * 1024 * 1024,
        ),
    )(patches, w_img, base)

    # Drop Cout / M padding; (N, Cout, Hout*Wout) is already NCHW order.
    out = out_padded[:, :Cout, :M].reshape(N, Cout, Hout, Wout)
    return out.astype(orig_dtype)


if __name__ == "__main__":
    N, Cin, H, W = 2, 4, 16, 16
    Cout, K = 8, 3

    key = jax.random.PRNGKey(0)
    kx, kwgt, kb = jax.random.split(key, 3)

    x = jax.random.normal(kx, (N, Cin, H, W), dtype=jnp.float32)

    # deterministic Conv2d-style init (kaiming-uniform bound = 1/sqrt(fan_in))
    fan_in = (Cin + 2) * K * K
    bound = 1.0 / math.sqrt(fan_in)
    weight = jax.random.uniform(
        kwgt, (Cout, Cin + 2, K, K), minval=-bound, maxval=bound, dtype=jnp.float32)
    bias = jax.random.uniform(
        kb, (Cout,), minval=-bound, maxval=bound, dtype=jnp.float32)

    out = coordconv2d_forward(x, weight, bias, K)
    out = jax.block_until_ready(out)
    assert out.shape == (N, Cout, H - K + 1, W - K + 1)

    # ---- references -----------------------------------------------------
    gx = jnp.broadcast_to(2.0 * (jnp.arange(W, dtype=jnp.float32) / (W - 1.0)) - 1.0, (H, W))
    gy = jnp.broadcast_to((2.0 * (jnp.arange(H, dtype=jnp.float32) / (H - 1.0)) - 1.0)[:, None], (H, W))
    coords = jnp.broadcast_to(jnp.stack([gx, gy], 0)[None], (N, 2, H, W))
    dn = ("NCHW", "OIHW", "NCHW")

    # (a) full-f32 CoordConv reference (torch semantics) -- loose tol, since the
    #     kernel's image path uses bf16 operands with f32 accumulation.
    xc = jnp.concatenate([x, coords], axis=1)
    ref_f32 = lax.conv_general_dilated(
        xc, weight, (1, 1), "VALID", dimension_numbers=dn,
        precision=lax.Precision.HIGHEST) + bias[None, :, None, None]

    # (b) the exact math the kernel computes (image path quantized to bf16,
    #     coord path in f32, f32 accumulation and f32 output) -- tight tol.
    xq = x.astype(jnp.bfloat16).astype(jnp.float32)
    wq_in = weight[:, :Cin].astype(jnp.bfloat16).astype(jnp.float32)
    ref_q = (lax.conv_general_dilated(xq, wq_in, (1, 1), "VALID", dimension_numbers=dn,
                                      precision=lax.Precision.HIGHEST)
             + lax.conv_general_dilated(coords[:1], weight[:, Cin:], (1, 1), "VALID",
                                        dimension_numbers=dn,
                                        precision=lax.Precision.HIGHEST)
             + bias[None, :, None, None])

    np.testing.assert_allclose(np.asarray(out), np.asarray(ref_q), atol=2e-3, rtol=2e-3)
    np.testing.assert_allclose(np.asarray(out), np.asarray(ref_f32), atol=5e-2, rtol=5e-2)
    print("KERNEL_OK")
</pallas_src>

<mosaic_0001>
module attributes {stable_mosaic.version = 11 : i64} {
  func.func @_ccconv_kernel(%arg0: i32, %arg1: i32, %arg2: memref<1x48x128xbf16, #tpu.memory_space<vmem>>, %arg3: memref<8x48xbf16, #tpu.memory_space<vmem>>, %arg4: memref<8x128xf32, #tpu.memory_space<vmem>>, %arg5: memref<1x8x128xf32, #tpu.memory_space<vmem>>) attributes {dimension_semantics = [#tpu.dimension_semantics<parallel>, #tpu.dimension_semantics<parallel>], iteration_bounds = array<i64: 2, 2>, scalar_prefetch = 0 : i64, scratch_operands = 0 : i64, tpu.core_type = #tpu.core_type<tc>, window_params = [{transform_indices = @transform_0, window_bounds = array<i64: 1, 48, 128>}, {pipeline_mode = #tpu.pipeline_mode<synchronous>, transform_indices = @transform_1, window_bounds = array<i64: 8, 48>}, {transform_indices = @transform_2, window_bounds = array<i64: 8, 128>}, {transform_indices = @transform_3, window_bounds = array<i64: 1, 8, 128>}]} {
    %c0 = arith.constant 0 : index
    %c0_0 = arith.constant 0 : index
    %0 = vector.load %arg3[%c0, %c0_0] : memref<8x48xbf16, #tpu.memory_space<vmem>>, vector<8x48xbf16>
    %c0_1 = arith.constant 0 : index
    %c0_2 = arith.constant 0 : index
    %c0_3 = arith.constant 0 : index
    %1 = vector.load %arg2[%c0_1, %c0_2, %c0_3] : memref<1x48x128xbf16, #tpu.memory_space<vmem>>, vector<1x48x128xbf16>
    %2 = vector.shape_cast %1 : vector<1x48x128xbf16> to vector<48x128xbf16>
    %cst = arith.constant dense<0.000000e+00> : vector<8x128xf32>
    %3 = tpu.matmul %0, %2, %cst {dimension_numbers = #tpu.dot_dimension_numbers<[1], [0], [0], [1], [0, 0, 1, 1], [], []>} : vector<8x48xbf16>, vector<48x128xbf16>, vector<8x128xf32> -> vector<8x128xf32>
    %c0_4 = arith.constant 0 : index
    %c0_5 = arith.constant 0 : index
    %4 = vector.load %arg4[%c0_4, %c0_5] : memref<8x128xf32, #tpu.memory_space<vmem>>, vector<8x128xf32>
    %5 = arith.addf %3, %4 : vector<8x128xf32>
    %c0_6 = arith.constant 0 : index
    %c0_7 = arith.constant 0 : index
    %c0_8 = arith.constant 0 : index
    %6 = vector.load %arg5[%c0_6, %c0_7, %c0_8] : memref<1x8x128xf32, #tpu.memory_space<vmem>>, vector<1x8x128xf32>
    %7 = vector.shape_cast %6 : vector<1x8x128xf32> to vector<8x128xf32>
    %8 = vector.shape_cast %5 : vector<8x128xf32> to vector<1x8x128xf32>
    tpu.vector_store %arg5[%c0_6, %c0_7, %c0_8], %8 {strides = array<i32>} : memref<1x8x128xf32, #tpu.memory_space<vmem>>, vector<1x8x128xf32>,
    return
  }
  func.func @transform_0(%arg0: i32, %arg1: i32) -> (i32, i32, i32) {
    %c0_i32 = arith.constant 0 : i32
    %c0_i32_0 = arith.constant 0 : i32
    return %arg0, %c0_i32, %arg1 : i32, i32, i32
  }
  func.func @transform_1(%arg0: i32, %arg1: i32) -> (i32, i32) {
    %c0_i32 = arith.constant 0 : i32
    %c0_i32_0 = arith.constant 0 : i32
    %c0_i32_1 = arith.constant 0 : i32
    return %c0_i32, %c0_i32_0 : i32, i32
  }
  func.func @transform_2(%arg0: i32, %arg1: i32) -> (i32, i32) {
    %c0_i32 = arith.constant 0 : i32
    %c0_i32_0 = arith.constant 0 : i32
    return %c0_i32, %arg1 : i32, i32
  }
  func.func @transform_3(%arg0: i32, %arg1: i32) -> (i32, i32, i32) {
    %c0_i32 = arith.constant 0 : i32
    %c0_i32_0 = arith.constant 0 : i32
    return %arg0, %c0_i32, %arg1 : i32, i32, i32
  }
}

</mosaic_0001>

<llo_original>
// kernel: tpu_custom_call.1
$region0: #{tpu_custom_call.1}
  #allocation0 [shape = 'u32[]', space=smem, size = 0x4, offset = 0x4, fixed_abs, tag = 'smem constant byte address 0x4 - core index']
  #allocation1 [shape = 'u32[144,128]{1,0:T(1,128)}', space=vmem, size = 0x12000, scoped, tag = 'internal scratch']
  %s0 = inlined_call_operand.hbm [shape: bf16[2,48,256], index: 0, kind: input, shape index: {}]
  %s1 = inlined_call_operand.hbm [shape: bf16[8,48], index: 1, kind: input, shape index: {}]
  %s2 = inlined_call_operand.hbm [shape: f32[8,256], index: 2, kind: input, shape index: {}]
  %s3 = inlined_call_operand.hbm [shape: f32[2,8,256], index: 3, kind: output, shape index: {}]
  %s4 = sld [smem:[#allocation0]]
  $region57: #{tpu_custom_call.1} parent=0
    _
  %s6 = ssub.s32 1, %s4
  %s7 = scalar_select 0, %s6, %s4
  $region1: #{tpu_custom_call.1} parent=0
    #allocation2 [shape = 'u8[24576]{0}', space=vmem, size = 0x6000, scoped, tag = 'input window, operand 0']
    #allocation3 [shape = 's32[2]{0}', space=sflag, size = 0x8, scoped, tag = 'scoped memory for tpu_custom_call.1']
    #allocation4 [shape = 's32[2]{0}', space=sflag, size = 0x8, scoped, tag = 'scoped memory for tpu_custom_call.1']
    #allocation5 [shape = 'u8[2048]{0}', space=vmem, size = 0x800, scoped, tag = 'input window, operand 1, single buffered']
    #allocation6 [shape = 's32[1]{0}', space=sflag, size = 0x4, scoped, tag = 'scoped memory for tpu_custom_call.1']
    #allocation7 [shape = 'u8[8192]{0}', space=vmem, size = 0x2000, scoped, tag = 'input window, operand 2']
    #allocation8 [shape = 'u8[8192]{0}', space=vmem, size = 0x2000, scoped, tag = 'output window, operand 0']
    %8 = vsyncpa [#allocation3], 0
    %s9 = scalar_lea.sflag [#allocation3], 1
    %10 = vsyncpa %s9, 0
    %11 = vsyncpa [#allocation6], 0
    %12 = vsyncpa [#allocation4], 0
    %s13 = scalar_lea.sflag [#allocation4], 1
    %14 = vsyncpa %s13, 0
    loop: start=0, step=1, limit=6
    $region2: #{tpu_custom_call.1} parent=1 // loop_pre_header
      _
    $region3: #{tpu_custom_call.1} parent=1 // loop_header
      %s16 = sphi 0, %s20
      %p17 = scmp.ge.s32.totalorder %s16, 6
      %s23 = sphi 0, %s35
      %s24 = sphi 0, %s31
      %s25 = sphi 0, %s23
      %s26 = sphi 0, %s24
      %s27 = sphi 0, %s25
      %s28 = sphi 0, %s26
      %s40 = sphi 0, %s42
      %s43 = sphi 0, %s40
      %s44 = sphi 0, %s43
      %s60 = sphi 0, %s44
      %s64 = sphi 0, %s64
      %s66 = sphi 0, %s64
      %s67 = sphi 0, %s66
      %s81 = sphi 0, %s67
      %s87 = sphi 0, %s89
      %s90 = sphi 0, %s87
      %s91 = sphi 0, %s90
      %s107 = sphi 0, %s91
      %s115 = sphi 0, %s117
      %s118 = sphi 0, %s115
      %s119 = sphi 0, %s118
      %s135 = sphi 0, %s119
    $region4: #{tpu_custom_call.1} parent=1 // loop_header_branch
      %19 = sbr.rel (%p17) target = $region8
    $region5: #{tpu_custom_call.1} parent=1 // loop_body
      %s21 = ssub.s32 %s16, 1
      %s22 = ssub.s32 %s16, 2
      %s29 = sadd.s32 1, %s24
      %p30 = scmp.ge.s32.totalorder %s29, 2
      %s31 = scalar_select %p30, 0, %s29
      %s32 = sadd.s32 1, %s23
      %s33 = scalar_select %p30, %s32, %s23
      %p34 = scmp.ge.s32.totalorder %s33, 2
      %s35 = scalar_select %p34, 0, %s33
      %s36 = ssub.s32 %s23, %s35
      %s37 = ssub.s32 %s24, %s31
      %s38 = sor.u32 %s36, %s37
      %p39 = scmp.eq.s32.totalorder %s38, 0
      %s41 = sadd.s32 %s40, 1
      %s42 = scalar_select %p39, %s40, %s41
      %p45 = pneg %p39
      %p46 = scmp.eq.s32.totalorder %s16, 3
      %p47 = por %p45, %p46
      %p48 = scmp.ne.s32.totalorder %s40, %s43
      %p49 = scmp.eq.s32.totalorder %s16, 0
      %p50 = por %p48, %p49
      %p51 = scmp.ne.s32.totalorder %s40, %s43
      %p52 = scmp.eq.s32.totalorder %s21, 3
      %p53 = por %p51, %p52
      %p54 = scmp.ne.s32.totalorder %s43, %s44
      %p55 = scmp.eq.s32.totalorder %s21, 0
      %p56 = por %p54, %p55
      %p57 = scmp.ne.s32.totalorder %s43, %s44
      %p58 = scmp.eq.s32.totalorder %s22, 3
      %p59 = por %p57, %p58
      %p61 = scmp.ne.s32.totalorder %s44, %s60
      %p62 = scmp.eq.s32.totalorder %s22, 0
      %p63 = por %p61, %p62
      %s65 = sadd.s32 %s64, 1
      %p68 = scmp.eq.s32.totalorder %s16, 3
      %p69 = scmp.ne.s32.totalorder %s64, %s66
      %p70 = scmp.eq.s32.totalorder %s16, 0
      %p71 = por %p69, %p70
      %p72 = scmp.ne.s32.totalorder %s64, %s66
      %p73 = scmp.eq.s32.totalorder %s21, 3
      %p74 = por %p72, %p73
      %p75 = scmp.ne.s32.totalorder %s66, %s67
      %p76 = scmp.eq.s32.totalorder %s21, 0
      %p77 = por %p75, %p76
      %p78 = scmp.ne.s32.totalorder %s66, %s67
      %p79 = scmp.eq.s32.totalorder %s22, 3
      %p80 = por %p78, %p79
      %p82 = scmp.ne.s32.totalorder %s67, %s81
      %p83 = scmp.eq.s32.totalorder %s22, 0
      %p84 = por %p82, %p83
      %s85 = ssub.s32 %s24, %s31
      %p86 = scmp.eq.s32.totalorder %s85, 0
      %s88 = sadd.s32 %s87, 1
      %s89 = scalar_select %p86, %s87, %s88
      %p92 = pneg %p86
      %p93 = scmp.eq.s32.totalorder %s16, 3
      %p94 = por %p92, %p93
      %p95 = scmp.ne.s32.totalorder %s87, %s90
      %p96 = scmp.eq.s32.totalorder %s16, 0
      %p97 = por %p95, %p96
      %p98 = scmp.ne.s32.totalorder %s87, %s90
      %p99 = scmp.eq.s32.totalorder %s21, 3
      %p100 = por %p98, %p99
      %p101 = scmp.ne.s32.totalorder %s90, %s91
      %p102 = scmp.eq.s32.totalorder %s21, 0
      %p103 = por %p101, %p102
      %p104 = scmp.ne.s32.totalorder %s90, %s91
      %p105 = scmp.eq.s32.totalorder %s22, 3
      %p106 = por %p104, %p105
      %p108 = scmp.ne.s32.totalorder %s91, %s107
      %p109 = scmp.eq.s32.totalorder %s22, 0
      %p110 = por %p108, %p109
      %s111 = ssub.s32 %s23, %s35
      %s112 = ssub.s32 %s24, %s31
      %s113 = sor.u32 %s111, %s112
      %p114 = scmp.eq.s32.totalorder %s113, 0
      %s116 = sadd.s32 %s115, 1
      %s117 = scalar_select %p114, %s115, %s116
      %p120 = pneg %p114
      %p121 = scmp.eq.s32.totalorder %s16, 3
      %p122 = por %p120, %p121
      %p123 = scmp.ne.s32.totalorder %s115, %s118
      %p124 = scmp.eq.s32.totalorder %s16, 0
      %p125 = por %p123, %p124
      %p126 = scmp.ne.s32.totalorder %s115, %s118
      %p127 = scmp.eq.s32.totalorder %s21, 3
      %p128 = por %p126, %p127
      %p129 = scmp.ne.s32.totalorder %s118, %s119
      %p130 = scmp.eq.s32.totalorder %s21, 0
      %p131 = por %p129, %p130
      %p132 = scmp.ne.s32.totalorder %s118, %s119
      %p133 = scmp.eq.s32.totalorder %s22, 3
      %p134 = por %p132, %p133
      %p136 = scmp.ne.s32.totalorder %s119, %s135
      %p137 = scmp.eq.s32.totalorder %s22, 0
      %p138 = por %p136, %p137
      %p139 = scmp.le.s32.totalorder 1, %s16
      %p140 = scmp.lt.s32.totalorder %s16, 5
      %p141 = pnand %p139, %p140
      %p142 = pneg %p141
      // Predicated region
      $region9: #{tpu_custom_call.1} parent=5 // pred_check
        _
      $region10: #{tpu_custom_call.1} parent=5 // pred_check_branch
        %144 = sbr.rel (%p141) target = $region12
      $region11: #{tpu_custom_call.1} parent=5 // pred_region
        %s145 = ssub.s32 %s16, 1
        // Predicated region
        $region13: #{tpu_custom_call.1} parent=11 // pred_check
          %p146 = pneg %p77
        $region14: #{tpu_custom_call.1} parent=11 // pred_check_branch
          %148 = sbr.rel (%p146) target = $region16
        $region15: #{tpu_custom_call.1} parent=11 // pred_region
          %s150 = ssub.s32 64, 64
          %151 = vsyncadd [#allocation6], %s150
          %s153 = sshll.u32 [#allocation5], 4
          %s154 = int_to_ptr.vmem [resolvable:$true] %s153
          %156 = dma.hbm_to_vmem [thread:$0]  %s1, 64, %s154, [#allocation6]
        $region16: #{tpu_custom_call.1} parent=11 // pred_fallthru
          _
      $region12: #{tpu_custom_call.1} parent=5 // pred_fallthru
        _
      %p157 = scmp.lt.s32.totalorder %s16, 4
      // Predicated region
      $region17: #{tpu_custom_call.1} parent=5 // pred_check
        %p158 = pneg %p157
      $region18: #{tpu_custom_call.1} parent=5 // pred_check_branch
        %160 = sbr.rel (%p158) target = $region20
      $region19: #{tpu_custom_call.1} parent=5 // pred_region
        // Predicated region
        $region21: #{tpu_custom_call.1} parent=19 // pred_check
          %p161 = pneg %p50
        $region22: #{tpu_custom_call.1} parent=19 // pred_check_branch
          %163 = sbr.rel (%p161) target = $region24
        $region23: #{tpu_custom_call.1} parent=19 // pred_region
          %s164 = sand.u32 %s16, 1
          %s165 = scalar_lea.sflag [#allocation3], %s164
          %s166 = sand.u32 %s40, 1
          %s167 = smul.addr %s166, 24
          %s168 = scalar_lea.vmem [#allocation2], %s167
          %s170 = ssub.s32 384, 384
          %171 = vsyncadd %s165, %s170
          %s172 = smul.addr %s23, 12
          %s173 = sadd.s32 %s24, %s172
          %s174 = smul.addr %s173, 64
          %s175 = scalar_lea.hbm %s0, %s174
          %s176 = sshll.u32 %s168, 4
          %s177 = int_to_ptr.vmem [resolvable:$true] %s176
          %182 = dma.hbm_to_vmem [thread:$0]  %s175, 384, %s177, %s165, 128, 64, 4
        $region24: #{tpu_custom_call.1} parent=19 // pred_fallthru
          _
        // Predicated region
        $region25: #{tpu_custom_call.1} parent=19 // pred_check
          %p183 = pneg %p97
        $region26: #{tpu_custom_call.1} parent=19 // pred_check_branch
          %185 = sbr.rel (%p183) target = $region28
        $region27: #{tpu_custom_call.1} parent=19 // pred_region
          %s186 = sand.u32 %s16, 1
          %s187 = scalar_lea.sflag [#allocation3], %s186
          %s188 = sand.u32 %s87, 1
          %s189 = smul.addr %s188, 8
          %s190 = scalar_lea.vmem [#allocation7], %s189
          %s192 = ssub.s32 128, 128
          %193 = vsyncadd %s187, %s192
          %s194 = smul.addr %s24, 128
          %s195 = scalar_lea.hbm %s2, %s194
          %s197 = sshll.u32 %s190, 4
          %s198 = int_to_ptr.vmem [resolvable:$true] %s197
          %200 = dma.hbm_to_vmem [thread:$0]  %s195, 128, %s198, %s187
        $region28: #{tpu_custom_call.1} parent=19 // pred_fallthru
          _
      $region20: #{tpu_custom_call.1} parent=5 // pred_fallthru
        _
      %p201 = scmp.le.s32.totalorder 1, %s16
      %p202 = scmp.lt.s32.totalorder %s16, 5
      %p203 = pnand %p201, %p202
      %p204 = pneg %p203
      // Predicated region
      $region29: #{tpu_custom_call.1} parent=5 // pred_check
        _
      $region30: #{tpu_custom_call.1} parent=5 // pred_check_branch
        %206 = sbr.rel (%p203) target = $region32
      $region31: #{tpu_custom_call.1} parent=5 // pred_region
        %s207 = ssub.s32 %s16, 1
        %s208 = sand.u32 %s21, 1
        %s209 = scalar_lea.sflag [#allocation3], %s208
        %s210 = sand.u32 %s43, 1
        %s211 = smul.addr %s210, 24
        %s212 = scalar_lea.vmem [#allocation2], %s211
        // Predicated region
        $region33: #{tpu_custom_call.1} parent=31 // pred_check
          %p213 = pneg %p56
        $region34: #{tpu_custom_call.1} parent=31 // pred_check_branch
          %215 = sbr.rel (%p213) target = $region36
        $region35: #{tpu_custom_call.1} parent=31 // pred_region
          %216 = dma.done %s209, 384
        $region36: #{tpu_custom_call.1} parent=31 // pred_fallthru
          _
        // Predicated region
        $region37: #{tpu_custom_call.1} parent=31 // pred_check
          %p217 = pneg %p77
        $region38: #{tpu_custom_call.1} parent=31 // pred_check_branch
          %219 = sbr.rel (%p217) target = $region40
        $region39: #{tpu_custom_call.1} parent=31 // pred_region
          %220 = dma.done [#allocation6], 64
        $region40: #{tpu_custom_call.1} parent=31 // pred_fallthru
          _
        %s221 = sand.u32 %s21, 1
        %s222 = scalar_lea.sflag [#allocation3], %s221
        %s223 = sand.u32 %s90, 1
        %s224 = smul.addr %s223, 8
        %s225 = scalar_lea.vmem [#allocation7], %s224
        // Predicated region
        $region41: #{tpu_custom_call.1} parent=31 // pred_check
          %p226 = pneg %p103
        $region42: #{tpu_custom_call.1} parent=31 // pred_check_branch
          %228 = sbr.rel (%p226) target = $region44
        $region43: #{tpu_custom_call.1} parent=31 // pred_region
          %229 = dma.done %s222, 128
        $region44: #{tpu_custom_call.1} parent=31 // pred_fallthru
          _
        %s230 = sand.u32 %s21, 1
        %s231 = scalar_lea.sflag [#allocation3], %s230
        %s232 = sand.u32 %s43, 1
        %s233 = smul.addr %s232, 24
        %s234 = scalar_lea.vmem [#allocation2], %s233
        %p235 = pneg %p56
        %p236 = pneg %p53
        %p237 = pneg %p77
        %p238 = pneg %p74
        %s239 = sand.u32 %s21, 1
        %s240 = scalar_lea.sflag [#allocation3], %s239
        %s241 = sand.u32 %s90, 1
        %s242 = smul.addr %s241, 8
        %s243 = scalar_lea.vmem [#allocation7], %s242
        %p244 = pneg %p103
        %p245 = pneg %p100
        %p246 = pneg %p131
        %p247 = pneg %p128
        %s248 = sand.u32 %s118, 1
        %s249 = scalar_lea.sflag [#allocation4], %s248
        %s250 = sand.u32 %s118, 1
        %s251 = smul.addr %s250, 8
        %s252 = scalar_lea.vmem [#allocation8], %s251
        %v254 = vld [vmem:[#allocation5] sm:$0xf]
        %v255 = vld [vmem:[%s212] sm:$0xf]
        %v256 = vld [vmem:[%s212 + $0x4] sm:$0xf]
        %v257 = vld [vmem:[%s212 + $0x8] sm:$0xf]
        %v258 = vld [vmem:[%s212 + $0xc] sm:$0xf]
        %v259 = vld [vmem:[%s212 + $0x10] sm:$0xf]
        %v260 = vld [vmem:[%s212 + $0x14] sm:$0xf]
        %v261 = vld [vmem:[%s225] sm:$0xff]
        %v268 = vunpack.c.l.b16 %v255
        %v269 = vunpack.c.l.b16 %v256
        %v270 = vunpack.c.l.b16 %v257
        %v271 = vunpack.c.l.b16 %v258
        %v272 = vunpack.c.l.b16 %v259
        %v273 = vunpack.c.l.b16 %v260
        %v274 = vpack.c.b16 %v269, %v268
        %v275 = vpack.c.b16 %v271, %v270
        %v276 = vpack.c.b16 %v273, %v272
        %vm280 = vcmask 392192
        %v282 = vsel %vm280, %v254, 0
        %284 = vmatprep.subr.bf16.mxu0 0
        %285 = vmatpush1.bf16.msra.mxu0 0
        %286 = vmatprep.subr.bf16.mxu0 0
        %287 = vmatpush1.bf16.msra.mxu0 0
        %288 = vmatprep.subr.bf16.mxu0 0
        %289 = vmatpush1.bf16.msra.mxu0 0
        %290 = vmatprep.subr.bf16.mxu0 0
        %291 = vmatpush1.bf16.msra.mxu0 0
        %292 = vmatprep.subr.bf16.mxu0 0
        %293 = vmatpush1.bf16.msra.mxu0 0
        %294 = vmatprep.subr.bf16.mxu0 0
        %295 = vmatpush1.bf16.msra.mxu0 %v276
        %296 = vmatprep.subr.bf16.mxu0 0
        %297 = vmatpush1.bf16.msra.mxu0 %v275
        %298 = vmatprep.subr.bf16.mxu0 0
        %299 = vmatpush1.bf16.msra.mxu0 %v274
        %300 = vmatprep.subr.bf16.mxu0 0
        %301 = vmatpush2.bf16.msra.mxu0 0
        %302 = vmatprep.subr.bf16.mxu0 0
        %303 = vmatpush2.bf16.msra.mxu0 0
        %304 = vmatprep.subr.bf16.mxu0 0
        %305 = vmatpush2.bf16.msra.mxu0 0
        %306 = vmatprep.subr.bf16.mxu0 0
        %307 = vmatpush2.bf16.msra.mxu0 0
        %308 = vmatprep.subr.bf16.mxu0 0
        %309 = vmatpush2.bf16.msra.mxu0 0
        %310 = vmatprep.subr.bf16.mxu0 0
        %311 = vmatpush2.bf16.msra.mxu0 0
        %312 = vmatprep.subr.bf16.mxu0 0
        %313 = vmatpush2.bf16.msra.mxu0 0
        %314 = vmatprep.subr.bf16.mxu0 0
        %315 = vmatpush2.bf16.msra.mxu0 0
        %316 = vmatprep.mubr.bf16.mxu0 0
        %317 = vmatmul.mubr.bf16.gmra.mxu0 %v282
        %v318 = vpop.f32.mrf.mxu0
        %v319 = vadd.f32 %v261, %v318
        %v320 = vpop.f32.mrf.mxu0
        %v321 = vpop.f32.mrf.mxu0
        %v322 = vpop.f32.mrf.mxu0
        %323 = vdwg.mxu0
        %324 = vst [vmem:[%s252] sm:$0xff] %v319
        %s325 = sand.u32 %s118, 1
        %s326 = scalar_lea.sflag [#allocation4], %s325
        %s327 = sand.u32 %s118, 1
        %s328 = smul.addr %s327, 8
        %s329 = scalar_lea.vmem [#allocation8], %s328
        // Predicated region
        $region45: #{tpu_custom_call.1} parent=31 // pred_check
          %p330 = pneg %p128
        $region46: #{tpu_custom_call.1} parent=31 // pred_check_branch
          %332 = sbr.rel (%p330) target = $region48
        $region47: #{tpu_custom_call.1} parent=31 // pred_region
          %s334 = ssub.s32 128, 128
          %335 = vsyncadd %s326, %s334
          %s336 = smul.addr %s25, 2
          %s337 = sadd.s32 %s26, %s336
          %s338 = smul.addr %s337, 128
          %s339 = scalar_lea.hbm %s3, %s338
          %s341 = sshll.u32 %s329, 4
          %s342 = int_to_ptr.vmem [resolvable:$true] %s341
          %344 = dma.vmem_to_hbm [thread:$0]  %s342, 128, %s339, %s326
        $region48: #{tpu_custom_call.1} parent=31 // pred_fallthru
          _
      $region32: #{tpu_custom_call.1} parent=5 // pred_fallthru
        _
      %p345 = scmp.le.s32.totalorder 2, %s16
      // Predicated region
      $region49: #{tpu_custom_call.1} parent=5 // pred_check
        %p346 = pneg %p345
      $region50: #{tpu_custom_call.1} parent=5 // pred_check_branch
        %348 = sbr.rel (%p346) target = $region52
      $region51: #{tpu_custom_call.1} parent=5 // pred_region
        %s349 = ssub.s32 %s16, 2
        // Predicated region
        $region53: #{tpu_custom_call.1} parent=51 // pred_check
          %p350 = pneg %p134
        $region54: #{tpu_custom_call.1} parent=51 // pred_check_branch
          %352 = sbr.rel (%p350) target = $region56
        $region55: #{tpu_custom_call.1} parent=51 // pred_region
          %s353 = sand.u32 %s119, 1
          %s354 = scalar_lea.sflag [#allocation4], %s353
          %s355 = sand.u32 %s119, 1
          %s356 = smul.addr %s355, 8
          %s357 = scalar_lea.vmem [#allocation8], %s356
          %358 = dma.done %s354, 128
        $region56: #{tpu_custom_call.1} parent=51 // pred_fallthru
          _
      $region52: #{tpu_custom_call.1} parent=5 // pred_fallthru
        _
    $region6: #{tpu_custom_call.1} parent=1 // loop_footer
      %s20 = sadd.s32 1, %s16
    $region7: #{tpu_custom_call.1} parent=1 // loop_footer_branch
      %15 = sbr.rel target = $region3
    $region8: #{tpu_custom_call.1} parent=1 // loop_exit
      _
    %359 = vsyncpa [#allocation3], 1
    %s360 = scalar_lea.sflag [#allocation3], 1
    %361 = vsyncpa %s360, 1
    %362 = vsyncpa [#allocation6], 1
    %363 = vsyncpa [#allocation4], 1
    %s364 = scalar_lea.sflag [#allocation4], 1
    %365 = vsyncpa %s364, 1

</llo_original>
